<compile_context>
chip_gen: v6e
topology: v6e:2x2x1
jax: 0.10.0
libtpu: 0.0.40
codegen_flags: <defaults>
</compile_context>

<pallas_src>
import math

import jax
import jax.numpy as jnp
from jax.experimental import pallas as pl
from jax.experimental.pallas import tpu as pltpu

C_IN = 15
C_OUT = 20
KW = 3

# ~16K columns per block: ( (16+24) sublanes * 16384 lanes * 4B ) * 2 (dbl-buf)
# plus in-kernel temporaries stays well under 32 MiB on every TPU generation,
# while each block moves >2 MiB of HBM traffic (per-step overhead amortized).
TARGET_BLOCK_COLS = 16384


def _conv1x3_tanh_kernel(x_ref, w_ref, o_ref):
    # x_ref: (C_IN, TN) f32   -- TN = rows_per_block * W, lane-dense
    # w_ref: (KW, C_OUT, C_IN) f32 (constant index_map -> stays VMEM resident)
    # o_ref: (C_OUT, TN)
    x = x_ref[...]

    # tap 0: unshifted
    acc = jnp.dot(w_ref[0], x, preferred_element_type=jnp.float32)
    # taps 1, 2: shift the block left by kw lanes, zero-fill the tail.  The
    # zero-filled / cross-row columns only land on outputs that are dropped.
    for kw in range(1, KW):
        shifted = jnp.concatenate(
            [x[:, kw:], jnp.zeros((x.shape[0], kw), dtype=x.dtype)], axis=1
        )
        acc = acc + jnp.dot(w_ref[kw], shifted, preferred_element_type=jnp.float32)

    o_ref[...] = jnp.tanh(acc).astype(o_ref.dtype)


def conv1x3_tanh(x_nchw, weight):
    """x_nchw: (N, C_IN, H, W) float32; weight: (C_OUT, C_IN, 1, KW) float32."""
    N, C, H, W = x_nchw.shape
    assert C == C_IN and weight.shape == (C_OUT, C_IN, 1, KW)
    W_OUT = W - KW + 1
    assert W_OUT > 0, "input width too small for kernel_size=(1,3), padding=0"

    R = N * H  # independent 1-D conv rows (kernel height is 1)

    # NCHW -> (C, N, H, W) -> (C_IN, R*W): channel on sublanes, row*W on lanes.
    x_flat = jnp.transpose(x_nchw, (1, 0, 2, 3)).reshape(C_IN, R * W)

    # Rows per block: TR must keep TR*W a multiple of 128 (lane tiling), blocks
    # should be multi-MiB, and small inputs should still yield >= 2 grid steps.
    tr_unit = 128 // math.gcd(W, 128)
    target_rows = max(tr_unit, (TARGET_BLOCK_COLS // W) // tr_unit * tr_unit)
    tr = min(target_rows, tr_unit * max(1, -(-R // (2 * tr_unit))))
    r_pad = -(-R // tr) * tr
    if r_pad > R:
        x_flat = jnp.pad(x_flat, ((0, 0), (0, (r_pad - R) * W)))

    tn = tr * W                       # block width in lanes (multiple of 128)
    grid = (r_pad // tr,)

    # (Cout, Cin, 1, KW) -> (KW, Cout, Cin)
    w_taps = jnp.transpose(weight[:, :, 0, :], (2, 0, 1))

    y_flat = pl.pallas_call(
        _conv1x3_tanh_kernel,
        out_shape=jax.ShapeDtypeStruct((C_OUT, r_pad * W), x_nchw.dtype),
        grid_spec=pltpu.PrefetchScalarGridSpec(
            num_scalar_prefetch=0,
            grid=grid,
            in_specs=[
                pl.BlockSpec((C_IN, tn), lambda i: (0, i)),
                pl.BlockSpec((KW, C_OUT, C_IN), lambda i: (0, 0, 0)),
            ],
            out_specs=pl.BlockSpec((C_OUT, tn), lambda i: (0, i)),
        ),
        compiler_params=pltpu.CompilerParams(
            dimension_semantics=("parallel",),
            vmem_limit_bytes=32 * 1024 * 1024,
        ),
    )(x_flat, w_taps)

    # (C_OUT, R_pad*W) -> drop padded rows and the two invalid columns per row
    y = y_flat.reshape(C_OUT, r_pad, W)[:, :R, :W_OUT]
    y = y.reshape(C_OUT, N, H, W_OUT)
    return jnp.transpose(y, (1, 0, 2, 3))


if __name__ == "__main__":
    key = jax.random.PRNGKey(0)
    k_x, k_w = jax.random.split(key)

    # Small shapes consistent with the module: Cin=15 fixed by the conv,
    # width must be >= 3 for a valid (1,3) conv with padding=0.
    N, H, W = 2, 16, 16
    x = jax.random.normal(k_x, (N, C_IN, H, W), dtype=jnp.float32)

    # Deterministic Kaiming-uniform-like init for Conv2d weight (Cout, Cin, 1, KW)
    fan_in = C_IN * 1 * KW
    bound = 1.0 / math.sqrt(fan_in)
    weight = jax.random.uniform(
        k_w, (C_OUT, C_IN, 1, KW), dtype=jnp.float32, minval=-bound, maxval=bound
    )

    out = jax.block_until_ready(conv1x3_tanh(x, weight))

    # Reference check against XLA conv (NCHW, OIHW) + tanh
    ref = jnp.tanh(
        jax.lax.conv_general_dilated(
            x, weight, window_strides=(1, 1), padding="VALID",
            dimension_numbers=("NCHW", "OIHW", "NCHW"),
        )
    )
    assert out.shape == (N, C_OUT, H, W - KW + 1)
    max_err = float(jnp.max(jnp.abs(out - ref)))
    assert jnp.allclose(out, ref, atol=1e-4, rtol=1e-4), max_err

    print("KERNEL_OK")
</pallas_src>

<mosaic_0001>
module attributes {stable_mosaic.version = 11 : i64} {
  func.func @_conv1x3_tanh_kernel(%arg0: i32, %arg1: memref<15x256xf32, #tpu.memory_space<vmem>>, %arg2: memref<3x20x15xf32, #tpu.memory_space<vmem>>, %arg3: memref<20x256xf32, #tpu.memory_space<vmem>>) attributes {dimension_semantics = [#tpu.dimension_semantics<parallel>], iteration_bounds = array<i64: 2>, scalar_prefetch = 0 : i64, scratch_operands = 0 : i64, tpu.core_type = #tpu.core_type<tc>, window_params = [{transform_indices = @transform_0, window_bounds = array<i64: 15, 256>}, {pipeline_mode = #tpu.pipeline_mode<synchronous>, transform_indices = @transform_1, window_bounds = array<i64: 3, 20, 15>}, {transform_indices = @transform_2, window_bounds = array<i64: 20, 256>}]} {
    %c0 = arith.constant 0 : index
    %c0_0 = arith.constant 0 : index
    %0 = vector.load %arg1[%c0, %c0_0] : memref<15x256xf32, #tpu.memory_space<vmem>>, vector<15x256xf32>
    %c0_1 = arith.constant 0 : index
    %c0_2 = arith.constant 0 : index
    %c0_3 = arith.constant 0 : index
    %1 = vector.load %arg2[%c0_1, %c0_2, %c0_3] : memref<3x20x15xf32, #tpu.memory_space<vmem>>, vector<1x20x15xf32>
    %2 = vector.shape_cast %1 : vector<1x20x15xf32> to vector<20x15xf32>
    %cst = arith.constant dense<0.000000e+00> : vector<20x256xf32>
    %3 = tpu.matmul %2, %0, %cst {dimension_numbers = #tpu.dot_dimension_numbers<[1], [0], [0], [1], [0, 0, 1, 1], [], []>} : vector<20x15xf32>, vector<15x256xf32>, vector<20x256xf32> -> vector<20x256xf32>
    %4 = vector.extract_strided_slice %0 {offsets = [0, 1], sizes = [15, 255], strides = [1, 1]} : vector<15x256xf32> to vector<15x255xf32>
    %cst_4 = arith.constant 0.000000e+00 : f32
    %5 = vector.broadcast %cst_4 : f32 to vector<15x1xf32>
    %6 = tpu.concatenate %4, %5 in 1 : vector<15x255xf32>, vector<15x1xf32> -> vector<15x256xf32>
    %c1 = arith.constant 1 : index
    %c0_5 = arith.constant 0 : index
    %c0_6 = arith.constant 0 : index
    %7 = vector.load %arg2[%c1, %c0_5, %c0_6] : memref<3x20x15xf32, #tpu.memory_space<vmem>>, vector<1x20x15xf32>
    %8 = vector.shape_cast %7 : vector<1x20x15xf32> to vector<20x15xf32>
    %cst_7 = arith.constant dense<0.000000e+00> : vector<20x256xf32>
    %9 = tpu.matmul %8, %6, %cst_7 {dimension_numbers = #tpu.dot_dimension_numbers<[1], [0], [0], [1], [0, 0, 1, 1], [], []>} : vector<20x15xf32>, vector<15x256xf32>, vector<20x256xf32> -> vector<20x256xf32>
    %10 = arith.addf %3, %9 : vector<20x256xf32>
    %11 = vector.extract_strided_slice %0 {offsets = [0, 2], sizes = [15, 254], strides = [1, 1]} : vector<15x256xf32> to vector<15x254xf32>
    %cst_8 = arith.constant 0.000000e+00 : f32
    %12 = vector.broadcast %cst_8 : f32 to vector<15x2xf32>
    %13 = tpu.concatenate %11, %12 in 1 : vector<15x254xf32>, vector<15x2xf32> -> vector<15x256xf32>
    %c2 = arith.constant 2 : index
    %c0_9 = arith.constant 0 : index
    %c0_10 = arith.constant 0 : index
    %14 = vector.load %arg2[%c2, %c0_9, %c0_10] : memref<3x20x15xf32, #tpu.memory_space<vmem>>, vector<1x20x15xf32>
    %15 = vector.shape_cast %14 : vector<1x20x15xf32> to vector<20x15xf32>
    %cst_11 = arith.constant dense<0.000000e+00> : vector<20x256xf32>
    %16 = tpu.matmul %15, %13, %cst_11 {dimension_numbers = #tpu.dot_dimension_numbers<[1], [0], [0], [1], [0, 0, 1, 1], [], []>} : vector<20x15xf32>, vector<15x256xf32>, vector<20x256xf32> -> vector<20x256xf32>
    %17 = arith.addf %10, %16 : vector<20x256xf32>
    %18 = math.tanh %17 : vector<20x256xf32>
    %c0_12 = arith.constant 0 : index
    %c0_13 = arith.constant 0 : index
    %19 = vector.load %arg3[%c0_12, %c0_13] : memref<20x256xf32, #tpu.memory_space<vmem>>, vector<20x256xf32>
    tpu.vector_store %arg3[%c0_12, %c0_13], %18 {strides = array<i32>} : memref<20x256xf32, #tpu.memory_space<vmem>>, vector<20x256xf32>,
    return
  }
  func.func @transform_0(%arg0: i32) -> (i32, i32) {
    %c0_i32 = arith.constant 0 : i32
    %c0_i32_0 = arith.constant 0 : i32
    return %c0_i32, %arg0 : i32, i32
  }
  func.func @transform_1(%arg0: i32) -> (i32, i32, i32) {
    %c0_i32 = arith.constant 0 : i32
    %c0_i32_0 = arith.constant 0 : i32
    %c0_i32_1 = arith.constant 0 : i32
    %c0_i32_2 = arith.constant 0 : i32
    return %c0_i32, %c0_i32_0, %c0_i32_1 : i32, i32, i32
  }
  func.func @transform_2(%arg0: i32) -> (i32, i32) {
    %c0_i32 = arith.constant 0 : i32
    %c0_i32_0 = arith.constant 0 : i32
    return %c0_i32, %arg0 : i32, i32
  }
}

</mosaic_0001>

<llo_original>
// kernel: tpu_custom_call.1
$region0: #{tpu_custom_call.1}
  #allocation0 [shape = 'u32[]', space=smem, size = 0x4, offset = 0x4, fixed_abs, tag = 'smem constant byte address 0x4 - core index']
  #allocation1 [shape = 'u32[144,128]{1,0:T(1,128)}', space=vmem, size = 0x12000, scoped, tag = 'internal scratch']
  %s0 = inlined_call_operand.vmem [shape: f32[15,512], index: 0, kind: input, shape index: {}]
  %s1 = inlined_call_operand.vmem [shape: f32[3,20,15], index: 1, kind: input, shape index: {}]
  %s2 = inlined_call_operand.hbm [shape: f32[20,512], index: 2, kind: output, shape index: {}]
  %s3 = sld [smem:[#allocation0]]
  $region64: #{tpu_custom_call.1} parent=0
    _
  %s5 = ssub.s32 1, %s3
  %s6 = scalar_select 0, %s5, %s3
  $region1: #{tpu_custom_call.1} parent=0
    #allocation2 [shape = 'u8[32768]{0}', space=vmem, size = 0x8000, scoped, tag = 'input window, operand 0']
    #allocation3 [shape = 'u8[49152]{0}', space=vmem, size = 0xc000, scoped, tag = 'output window, operand 0']
    #allocation4 [shape = 's32[2]{0}', space=sflag, size = 0x8, scoped, tag = 'scoped memory for tpu_custom_call.1']
    %7 = vsyncpa [#allocation4], 0
    %s8 = scalar_lea.sflag [#allocation4], 1
    %9 = vsyncpa %s8, 0
    loop: start=0, step=1, limit=4
    $region2: #{tpu_custom_call.1} parent=1 // loop_pre_header
      _
    $region3: #{tpu_custom_call.1} parent=1 // loop_header
      %s11 = sphi 0, %s15
      %p12 = scmp.ge.s32.totalorder %s11, 4
      %s21 = sphi 0, %s23
      %s24 = sphi 0, %s21
      %s25 = sphi 0, %s24
      %s41 = sphi 0, %s25
      %s45 = sphi 0, %s45
      %s47 = sphi 0, %s45
      %s48 = sphi 0, %s47
      %s62 = sphi 0, %s48
      %s68 = sphi 0, %s70
      %s71 = sphi 0, %s68
      %s72 = sphi 0, %s71
      %s88 = sphi 0, %s72
    $region4: #{tpu_custom_call.1} parent=1 // loop_header_branch
      %14 = sbr.rel (%p12) target = $region8
    $region5: #{tpu_custom_call.1} parent=1 // loop_body
      %s16 = ssub.s32 %s11, 1
      %s17 = ssub.s32 %s11, 2
      %s18 = sadd.s32 %s11, 1
      %s19 = ssub.s32 %s11, %s18
      %p20 = scmp.eq.s32.totalorder %s19, 0
      %s22 = sadd.s32 %s21, 1
      %s23 = scalar_select %p20, %s21, %s22
      %p26 = pneg %p20
      %p27 = scmp.eq.s32.totalorder %s11, 1
      %p28 = por %p26, %p27
      %p29 = scmp.ne.s32.totalorder %s21, %s24
      %p30 = scmp.eq.s32.totalorder %s11, 0
      %p31 = por %p29, %p30
      %p32 = scmp.ne.s32.totalorder %s21, %s24
      %p33 = scmp.eq.s32.totalorder %s16, 1
      %p34 = por %p32, %p33
      %p35 = scmp.ne.s32.totalorder %s24, %s25
      %p36 = scmp.eq.s32.totalorder %s16, 0
      %p37 = por %p35, %p36
      %p38 = scmp.ne.s32.totalorder %s24, %s25
      %p39 = scmp.eq.s32.totalorder %s17, 1
      %p40 = por %p38, %p39
      %p42 = scmp.ne.s32.totalorder %s25, %s41
      %p43 = scmp.eq.s32.totalorder %s17, 0
      %p44 = por %p42, %p43
      %s46 = sadd.s32 %s45, 1
      %p49 = scmp.eq.s32.totalorder %s11, 1
      %p50 = scmp.ne.s32.totalorder %s45, %s47
      %p51 = scmp.eq.s32.totalorder %s11, 0
      %p52 = por %p50, %p51
      %p53 = scmp.ne.s32.totalorder %s45, %s47
      %p54 = scmp.eq.s32.totalorder %s16, 1
      %p55 = por %p53, %p54
      %p56 = scmp.ne.s32.totalorder %s47, %s48
      %p57 = scmp.eq.s32.totalorder %s16, 0
      %p58 = por %p56, %p57
      %p59 = scmp.ne.s32.totalorder %s47, %s48
      %p60 = scmp.eq.s32.totalorder %s17, 1
      %p61 = por %p59, %p60
      %p63 = scmp.ne.s32.totalorder %s48, %s62
      %p64 = scmp.eq.s32.totalorder %s17, 0
      %p65 = por %p63, %p64
      %s66 = ssub.s32 %s11, %s18
      %p67 = scmp.eq.s32.totalorder %s66, 0
      %s69 = sadd.s32 %s68, 1
      %s70 = scalar_select %p67, %s68, %s69
      %p73 = pneg %p67
      %p74 = scmp.eq.s32.totalorder %s11, 1
      %p75 = por %p73, %p74
      %p76 = scmp.ne.s32.totalorder %s68, %s71
      %p77 = scmp.eq.s32.totalorder %s11, 0
      %p78 = por %p76, %p77
      %p79 = scmp.ne.s32.totalorder %s68, %s71
      %p80 = scmp.eq.s32.totalorder %s16, 1
      %p81 = por %p79, %p80
      %p82 = scmp.ne.s32.totalorder %s71, %s72
      %p83 = scmp.eq.s32.totalorder %s16, 0
      %p84 = por %p82, %p83
      %p85 = scmp.ne.s32.totalorder %s71, %s72
      %p86 = scmp.eq.s32.totalorder %s17, 1
      %p87 = por %p85, %p86
      %p89 = scmp.ne.s32.totalorder %s72, %s88
      %p90 = scmp.eq.s32.totalorder %s17, 0
      %p91 = por %p89, %p90
      %p92 = scmp.le.s32.totalorder 1, %s11
      %p93 = scmp.lt.s32.totalorder %s11, 3
      %p94 = pnand %p92, %p93
      %p95 = pneg %p94
      // Predicated region
      $region9: #{tpu_custom_call.1} parent=5 // pred_check
        _
      $region10: #{tpu_custom_call.1} parent=5 // pred_check_branch
        %97 = sbr.rel (%p94) target = $region12
      $region11: #{tpu_custom_call.1} parent=5 // pred_region
        %s98 = ssub.s32 %s11, 1
        // Predicated region
        $region13: #{tpu_custom_call.1} parent=11 // pred_check
          %p99 = pneg %p58
        $region14: #{tpu_custom_call.1} parent=11 // pred_check_branch
          %101 = sbr.rel (%p99) target = $region16
        $region15: #{tpu_custom_call.1} parent=11 // pred_region
          _
        $region16: #{tpu_custom_call.1} parent=11 // pred_fallthru
          _
      $region12: #{tpu_custom_call.1} parent=5 // pred_fallthru
        _
      %p102 = scmp.lt.s32.totalorder %s11, 2
      // Predicated region
      $region17: #{tpu_custom_call.1} parent=5 // pred_check
        %p103 = pneg %p102
      $region18: #{tpu_custom_call.1} parent=5 // pred_check_branch
        %105 = sbr.rel (%p103) target = $region20
      $region19: #{tpu_custom_call.1} parent=5 // pred_region
        // Predicated region
        $region21: #{tpu_custom_call.1} parent=19 // pred_check
          %p106 = pneg %p31
        $region22: #{tpu_custom_call.1} parent=19 // pred_check_branch
          %108 = sbr.rel (%p106) target = $region24
        $region23: #{tpu_custom_call.1} parent=19 // pred_region
          %s109 = sand.u32 %s21, 1
          %s110 = sand.u32 %s21, 1
          %s111 = smul.addr %s110, 32
          %s112 = scalar_lea.vmem [#allocation2], %s111
          %s113 = smul.u32 2, %s11
          %s114 = smul.addr %s113, 8
          %s115 = scalar_lea.vmem %s0, %s114
          // Predicated region
          $region25: #{tpu_custom_call.1} parent=23 // pred_check
            _
          $region26: #{tpu_custom_call.1} parent=23 // pred_check_branch
            %117 = sbr.rel (0) target = $region28
          $region27: #{tpu_custom_call.1} parent=23 // pred_region
            // Predicated region
            $region29: #{tpu_custom_call.1} parent=27 // pred_check
              _
            $region30: #{tpu_custom_call.1} parent=27 // pred_check_branch
              %119 = sbr.rel (0) target = $region32
            $region31: #{tpu_custom_call.1} parent=27 // pred_region
              loop: start=0, step=1, limit=1
              $region33: #{tpu_custom_call.1} parent=31 // loop_pre_header
                _
              $region34: #{tpu_custom_call.1} parent=31 // loop_header
                %s121 = sphi 0, %s125
                %p122 = scmp.ge.s32.totalorder %s121, 1
                %s126 = sphi %s115, %s115
                %s127 = sphi %s112, %s112
              $region35: #{tpu_custom_call.1} parent=31 // loop_header_branch
                %124 = sbr.rel (%p122) target = $region39
              $region36: #{tpu_custom_call.1} parent=31 // loop_body
                %v128 = vld [vmem:[%s126] sm:$0xff]
                %129 = vst [vmem:[%s127] sm:$0xff] %v128
                %v130 = vld [vmem:[%s126 + $0x8] sm:$0xff]
                %131 = vst [vmem:[%s127 + $0x8] sm:$0xff] %v130
                %v132 = vld [vmem:[%s126 + $0x20] sm:$0xff]
                %133 = vst [vmem:[%s127 + $0x10] sm:$0xff] %v132
                %v134 = vld [vmem:[%s126 + $0x28] sm:$0xff]
                %135 = vst [vmem:[%s127 + $0x18] sm:$0xff] %v134
              $region37: #{tpu_custom_call.1} parent=31 // loop_footer
                %s125 = sadd.s32 1, %s121
              $region38: #{tpu_custom_call.1} parent=31 // loop_footer_branch
                %120 = sbr.rel target = $region34
              $region39: #{tpu_custom_call.1} parent=31 // loop_exit
                _
            $region32: #{tpu_custom_call.1} parent=27 // pred_fallthru
              _
            // Predicated region
            $region40: #{tpu_custom_call.1} parent=27 // pred_check
              _
            $region41: #{tpu_custom_call.1} parent=27 // pred_check_branch
              %137 = sbr.rel target = $region43
            $region42: #{tpu_custom_call.1} parent=27 // pred_region
              _
            $region43: #{tpu_custom_call.1} parent=27 // pred_fallthru
              _
          $region28: #{tpu_custom_call.1} parent=23 // pred_fallthru
            _
          %138 = vnop
        $region24: #{tpu_custom_call.1} parent=19 // pred_fallthru
          _
      $region20: #{tpu_custom_call.1} parent=5 // pred_fallthru
        _
      %p139 = scmp.le.s32.totalorder 1, %s11
      %p140 = scmp.lt.s32.totalorder %s11, 3
      %p141 = pnand %p139, %p140
      %p142 = pneg %p141
      // Predicated region
      $region44: #{tpu_custom_call.1} parent=5 // pred_check
        _
      $region45: #{tpu_custom_call.1} parent=5 // pred_check_branch
        %144 = sbr.rel (%p141) target = $region47
      $region46: #{tpu_custom_call.1} parent=5 // pred_region
        %s145 = ssub.s32 %s11, 1
        %s146 = sand.u32 %s24, 1
        %s147 = sand.u32 %s24, 1
        %s148 = smul.addr %s147, 32
        %s149 = scalar_lea.vmem [#allocation2], %s148
        // Predicated region
        $region48: #{tpu_custom_call.1} parent=46 // pred_check
          %p150 = pneg %p37
        $region49: #{tpu_custom_call.1} parent=46 // pred_check_branch
          %152 = sbr.rel (%p150) target = $region51
        $region50: #{tpu_custom_call.1} parent=46 // pred_region
          _
        $region51: #{tpu_custom_call.1} parent=46 // pred_fallthru
          _
        %s153 = sand.u32 %s24, 1
        %s154 = sand.u32 %s24, 1
        %s155 = smul.addr %s154, 32
        %s156 = scalar_lea.vmem [#allocation2], %s155
        %p157 = pneg %p37
        %p158 = pneg %p34
        %p159 = pneg %p58
        %p160 = pneg %p55
        %p161 = pneg %p84
        %p162 = pneg %p81
        %s163 = sand.u32 %s71, 1
        %s164 = scalar_lea.sflag [#allocation4], %s163
        %s165 = sand.u32 %s71, 1
        %s166 = smul.addr %s165, 48
        %s167 = scalar_lea.vmem [#allocation3], %s166
        %s168 = smul.u32 2, %s16
        %s169 = smul.u32 2, %s16
        %v170 = vld [vmem:[%s149] sm:$0xff]
        %v171 = vld [vmem:[%s149 + $0x8] sm:$0xff]
        %v172 = vld [vmem:[%s149 + $0x10] sm:$0x7f]
        %v173 = vld [vmem:[%s149 + $0x18] sm:$0x7f]
        %v174 = vld [vmem:[%s1] sm:$0xff]
        %v175 = vld [vmem:[%s1 + $0x8] sm:$0xff]
        %v176 = vld [vmem:[%s1 + $0x10] sm:$0xf]
        %181 = vrot.lane.b32.xlu0 %v170, 127
        %v182 = vpop.permute.xlu0 %181
        %183 = vrot.lane.b32.xlu0 %v171, 127
        %v184 = vpop.permute.xlu0 %183
        %185 = vrot.lane.b32.xlu0 %v172, 127
        %v186 = vpop.permute.xlu0 %185
        %187 = vrot.lane.b32.xlu0 %v173, 127
        %v188 = vpop.permute.xlu0 %187
        %vm189 = vcmask 1039360
        %v190 = vsel %vm189, %v182, %v184
        %v191 = vsel %vm189, %v186, %v188
        %v195 = vsel %vm189, %v184, 0.0
        %v196 = vsel %vm189, %v188, 0.0
        %s197 = scalar_lea.vmem %s1, 24
        %v198 = vld [vmem:[%s197] sm:$0xff]
        %v199 = vld [vmem:[%s197 + $0x8] sm:$0xff]
        %v200 = vld [vmem:[%s197 + $0x10] sm:$0xf]
        %vm201 = vcmask 121856
        %v203 = vsel %vm201, %v198, 0
        %v206 = vsel %vm201, %v199, 0
        %v209 = vsel %vm201, %v200, 0
        %vm211 = vcmask 1046528
        %v212 = vsel %vm211, %v191, 0
        %v215 = vsel %vm211, %v196, 0
        %217 = vmatprep.subr.mxu0 0.0
        %218 = vmatpush1.msra.mxu0 0.0
        %219 = vmatprep.subr.mxu0 0.0
        %220 = vmatpush1.msra.mxu0 0.0
        %221 = vmatprep.subr.mxu0 0.0
        %222 = vmatpush1.msra.mxu0 0.0
        %223 = vmatprep.subr.mxu0 0.0
        %224 = vmatpush1.msra.mxu0 0.0
        %225 = vmatprep.subr.mxu0 0.0
        %226 = vmatpush1.msra.mxu0 0.0
        %227 = vmatprep.subr.mxu0 0.0
        %228 = vmatpush1.msra.mxu0 0.0
        %229 = vmatprep.subr.mxu0 0.0
        %230 = vmatpush1.msra.mxu0 0.0
        %231 = vmatprep.subr.mxu0 0.0
        %232 = vmatpush1.msra.mxu0 0.0
        %233 = vmatprep.subr.mxu0 0.0
        %234 = vmatpush1.msra.mxu0 0.0
        %235 = vmatprep.subr.mxu0 0.0
        %236 = vmatpush1.msra.mxu0 0.0
        %237 = vmatprep.subr.mxu0 0.0
        %238 = vmatpush1.msra.mxu0 0.0
        %239 = vmatprep.subr.mxu0 0.0
        %240 = vmatpush1.msra.mxu0 0.0
        %241 = vmatprep.subr.mxu0 0.0
        %242 = vmatpush1.msra.mxu0 0.0
        %243 = vmatprep.subr.mxu0 0.0
        %244 = vmatpush1.msra.mxu0 0.0
        %245 = vmatprep.subr.mxu0 %v215
        %246 = vmatpush1.msra.mxu0 %v212
        %247 = vmatprep.subr.mxu0 %v195
        %248 = vmatpush1.msra.mxu0 %v190
        %249 = vmatprep.subr.mxu0 0.0
        %250 = vmatpush2.msra.mxu0 0.0
        %251 = vmatprep.subr.mxu0 0.0
        %252 = vmatpush2.msra.mxu0 0.0
        %253 = vmatprep.subr.mxu0 0.0
        %254 = vmatpush2.msra.mxu0 0.0
        %255 = vmatprep.subr.mxu0 0.0
        %256 = vmatpush2.msra.mxu0 0.0
        %257 = vmatprep.subr.mxu0 0.0
        %258 = vmatpush2.msra.mxu0 0.0
        %259 = vmatprep.subr.mxu0 0.0
        %260 = vmatpush2.msra.mxu0 0.0
        %261 = vmatprep.subr.mxu0 0.0
        %262 = vmatpush2.msra.mxu0 0.0
        %263 = vmatprep.subr.mxu0 0.0
        %264 = vmatpush2.msra.mxu0 0.0
        %265 = vmatprep.subr.mxu0 0.0
        %266 = vmatpush2.msra.mxu0 0.0
        %267 = vmatprep.subr.mxu0 0.0
        %268 = vmatpush2.msra.mxu0 0.0
        %269 = vmatprep.subr.mxu0 0.0
        %270 = vmatpush2.msra.mxu0 0.0
        %271 = vmatprep.subr.mxu0 0.0
        %272 = vmatpush2.msra.mxu0 0.0
        %273 = vmatprep.subr.mxu0 0.0
        %274 = vmatpush2.msra.mxu0 0.0
        %275 = vmatprep.subr.mxu0 0.0
        %276 = vmatpush2.msra.mxu0 0.0
        %277 = vmatprep.subr.mxu0 0.0
        %278 = vmatpush2.msra.mxu0 0.0
        %279 = vmatprep.subr.mxu0 0.0
        %280 = vmatpush2.msra.mxu0 0.0
        %281 = vmatprep.mubr.f32.mxu0 0.0
        %282 = vmatmul.mubr.f32.gmra.mxu0 %v203
        %v283 = vpop.f32.mrf.mxu0
        %v284 = vadd.f32 0.0, %v283
        %v285 = vpop.f32.mrf.mxu0
        %v286 = vadd.f32 0.0, %v285
        %287 = vmatprep.mubr.f32.mxu0 0.0
        %288 = vmatmul.mubr.f32.gmra.mxu0 %v206
        %v289 = vpop.f32.mrf.mxu0
        %v290 = vadd.f32 0.0, %v289
        %v291 = vpop.f32.mrf.mxu0
        %v292 = vadd.f32 0.0, %v291
        %293 = vmatprep.mubr.f32.mxu0 0.0
        %294 = vmatmul.mubr.f32.gmra.mxu0 %v209
        %v295 = vpop.f32.mrf.mxu0
        %v296 = vadd.f32 0.0, %v295
        %v297 = vpop.f32.mrf.mxu0
        %v298 = vadd.f32 0.0, %v297
        %299 = vdwg.mxu0
        %v301 = vsel %vm201, %v174, 0
        %v304 = vsel %vm201, %v175, 0
        %v307 = vsel %vm201, %v176, 0
        %v309 = vsel %vm211, %v172, 0
        %v311 = vsel %vm211, %v173, 0
        %313 = vmatprep.subr.mxu0 0.0
        %314 = vmatpush1.msra.mxu0 0.0
        %315 = vmatprep.subr.mxu0 0.0
        %316 = vmatpush1.msra.mxu0 0.0
        %317 = vmatprep.subr.mxu0 0.0
        %318 = vmatpush1.msra.mxu0 0.0
        %319 = vmatprep.subr.mxu0 0.0
        %320 = vmatpush1.msra.mxu0 0.0
        %321 = vmatprep.subr.mxu0 0.0
        %322 = vmatpush1.msra.mxu0 0.0
        %323 = vmatprep.subr.mxu0 0.0
        %324 = vmatpush1.msra.mxu0 0.0
        %325 = vmatprep.subr.mxu0 0.0
        %326 = vmatpush1.msra.mxu0 0.0
        %327 = vmatprep.subr.mxu0 0.0
        %328 = vmatpush1.msra.mxu0 0.0
        %329 = vmatprep.subr.mxu0 0.0
        %330 = vmatpush1.msra.mxu0 0.0
        %331 = vmatprep.subr.mxu0 0.0
        %332 = vmatpush1.msra.mxu0 0.0
        %333 = vmatprep.subr.mxu0 0.0
        %334 = vmatpush1.msra.mxu0 0.0
        %335 = vmatprep.subr.mxu0 0.0
        %336 = vmatpush1.msra.mxu0 0.0
        %337 = vmatprep.subr.mxu0 0.0
        %338 = vmatpush1.msra.mxu0 0.0
        %339 = vmatprep.subr.mxu0 0.0
        %340 = vmatpush1.msra.mxu0 0.0
        %341 = vmatprep.subr.mxu0 %v311
        %342 = vmatpush1.msra.mxu0 %v309
        %343 = vmatprep.subr.mxu0 %v171
        %344 = vmatpush1.msra.mxu0 %v170
        %345 = vmatprep.subr.mxu0 0.0
        %346 = vmatpush2.msra.mxu0 0.0
        %347 = vmatprep.subr.mxu0 0.0
        %348 = vmatpush2.msra.mxu0 0.0
        %349 = vmatprep.subr.mxu0 0.0
        %350 = vmatpush2.msra.mxu0 0.0
        %351 = vmatprep.subr.mxu0 0.0
        %352 = vmatpush2.msra.mxu0 0.0
        %353 = vmatprep.subr.mxu0 0.0
        %354 = vmatpush2.msra.mxu0 0.0
        %355 = vmatprep.subr.mxu0 0.0
        %356 = vmatpush2.msra.mxu0 0.0
        %357 = vmatprep.subr.mxu0 0.0
        %358 = vmatpush2.msra.mxu0 0.0
        %359 = vmatprep.subr.mxu0 0.0
        %360 = vmatpush2.msra.mxu0 0.0
        %361 = vmatprep.subr.mxu0 0.0
        %362 = vmatpush2.msra.mxu0 0.0
        %363 = vmatprep.subr.mxu0 0.0
        %364 = vmatpush2.msra.mxu0 0.0
        %365 = vmatprep.subr.mxu0 0.0
        %366 = vmatpush2.msra.mxu0 0.0
        %367 = vmatprep.subr.mxu0 0.0
        %368 = vmatpush2.msra.mxu0 0.0
        %369 = vmatprep.subr.mxu0 0.0
        %370 = vmatpush2.msra.mxu0 0.0
        %371 = vmatprep.subr.mxu0 0.0
        %372 = vmatpush2.msra.mxu0 0.0
        %373 = vmatprep.subr.mxu0 0.0
        %374 = vmatpush2.msra.mxu0 0.0
        %375 = vmatprep.subr.mxu0 0.0
        %376 = vmatpush2.msra.mxu0 0.0
        %377 = vmatprep.mubr.f32.mxu0 0.0
        %378 = vmatmul.mubr.f32.gmra.mxu0 %v301
        %v379 = vpop.f32.mrf.mxu0
        %v380 = vadd.f32 %v284, %v379
        %v381 = vpop.f32.mrf.mxu0
        %v382 = vadd.f32 %v286, %v381
        %383 = vmatprep.mubr.f32.mxu0 0.0
        %384 = vmatmul.mubr.f32.gmra.mxu0 %v304
        %v385 = vpop.f32.mrf.mxu0
        %v386 = vadd.f32 %v290, %v385
        %v387 = vpop.f32.mrf.mxu0
        %v388 = vadd.f32 %v292, %v387
        %389 = vmatprep.mubr.f32.mxu0 0.0
        %390 = vmatmul.mubr.f32.gmra.mxu0 %v307
        %v391 = vpop.f32.mrf.mxu0
        %v392 = vadd.f32 %v296, %v391
        %v393 = vpop.f32.mrf.mxu0
        %v394 = vadd.f32 %v298, %v393
        %395 = vdwg.mxu0
        %396 = vrot.lane.b32.xlu0 %v170, 126
        %v397 = vpop.permute.xlu0 %396
        %398 = vrot.lane.b32.xlu0 %v171, 126
        %v399 = vpop.permute.xlu0 %398
        %400 = vrot.lane.b32.xlu0 %v172, 126
        %v401 = vpop.permute.xlu0 %400
        %402 = vrot.lane.b32.xlu0 %v173, 126
        %v403 = vpop.permute.xlu0 %402
        %vm404 = vcmask 1031168
        %v405 = vsel %vm404, %v397, %v399
        %v406 = vsel %vm404, %v401, %v403
        %v410 = vsel %vm404, %v399, 0.0
        %v411 = vsel %vm404, %v403, 0.0
        %s412 = scalar_lea.vmem %s1, 48
        %v413 = vld [vmem:[%s412] sm:$0xff]
        %v414 = vld [vmem:[%s412 + $0x8] sm:$0xff]
        %v415 = vld [vmem:[%s412 + $0x10] sm:$0xf]
        %v417 = vsel %vm201, %v413, 0
        %v420 = vsel %vm201, %v414, 0
        %v423 = vsel %vm201, %v415, 0
        %v425 = vsel %vm211, %v406, 0
        %v428 = vsel %vm211, %v411, 0
        %430 = vmatprep.subr.mxu0 0.0
        %431 = vmatpush1.msra.mxu0 0.0
        %432 = vmatprep.subr.mxu0 0.0
        %433 = vmatpush1.msra.mxu0 0.0
        %434 = vmatprep.subr.mxu0 0.0
        %435 = vmatpush1.msra.mxu0 0.0
        %436 = vmatprep.subr.mxu0 0.0
        %437 = vmatpush1.msra.mxu0 0.0
        %438 = vmatprep.subr.mxu0 0.0
        %439 = vmatpush1.msra.mxu0 0.0
        %440 = vmatprep.subr.mxu0 0.0
        %441 = vmatpush1.msra.mxu0 0.0
        %442 = vmatprep.subr.mxu0 0.0
        %443 = vmatpush1.msra.mxu0 0.0
        %444 = vmatprep.subr.mxu0 0.0
        %445 = vmatpush1.msra.mxu0 0.0
        %446 = vmatprep.subr.mxu0 0.0
        %447 = vmatpush1.msra.mxu0 0.0
        %448 = vmatprep.subr.mxu0 0.0
        %449 = vmatpush1.msra.mxu0 0.0
        %450 = vmatprep.subr.mxu0 0.0
        %451 = vmatpush1.msra.mxu0 0.0
        %452 = vmatprep.subr.mxu0 0.0
        %453 = vmatpush1.msra.mxu0 0.0
        %454 = vmatprep.subr.mxu0 0.0
        %455 = vmatpush1.msra.mxu0 0.0
        %456 = vmatprep.subr.mxu0 0.0
        %457 = vmatpush1.msra.mxu0 0.0
        %458 = vmatprep.subr.mxu0 %v428
        %459 = vmatpush1.msra.mxu0 %v425
        %460 = vmatprep.subr.mxu0 %v410
        %461 = vmatpush1.msra.mxu0 %v405
        %462 = vmatprep.subr.mxu0 0.0
        %463 = vmatpush2.msra.mxu0 0.0
        %464 = vmatprep.subr.mxu0 0.0
        %465 = vmatpush2.msra.mxu0 0.0
        %466 = vmatprep.subr.mxu0 0.0
        %467 = vmatpush2.msra.mxu0 0.0
        %468 = vmatprep.subr.mxu0 0.0
        %469 = vmatpush2.msra.mxu0 0.0
        %470 = vmatprep.subr.mxu0 0.0
        %471 = vmatpush2.msra.mxu0 0.0
        %472 = vmatprep.subr.mxu0 0.0
        %473 = vmatpush2.msra.mxu0 0.0
        %474 = vmatprep.subr.mxu0 0.0
        %475 = vmatpush2.msra.mxu0 0.0
        %476 = vmatprep.subr.mxu0 0.0
        %477 = vmatpush2.msra.mxu0 0.0
        %478 = vmatprep.subr.mxu0 0.0
        %479 = vmatpush2.msra.mxu0 0.0
        %480 = vmatprep.subr.mxu0 0.0
        %481 = vmatpush2.msra.mxu0 0.0
        %482 = vmatprep.subr.mxu0 0.0
        %483 = vmatpush2.msra.mxu0 0.0
        %484 = vmatprep.subr.mxu0 0.0
        %485 = vmatpush2.msra.mxu0 0.0
        %486 = vmatprep.subr.mxu0 0.0
        %487 = vmatpush2.msra.mxu0 0.0
        %488 = vmatprep.subr.mxu0 0.0
        %489 = vmatpush2.msra.mxu0 0.0
        %490 = vmatprep.subr.mxu0 0.0
        %491 = vmatpush2.msra.mxu0 0.0
        %492 = vmatprep.subr.mxu0 0.0
        %493 = vmatpush2.msra.mxu0 0.0
        %494 = vmatprep.mubr.f32.mxu0 0.0
        %495 = vmatmul.mubr.f32.gmra.mxu0 %v417
        %v496 = vpop.f32.mrf.mxu0
        %v497 = vadd.f32 0.0, %v496
        %v498 = vpop.f32.mrf.mxu0
        %v499 = vadd.f32 0.0, %v498
        %500 = vmatprep.mubr.f32.mxu0 0.0
        %501 = vmatmul.mubr.f32.gmra.mxu0 %v420
        %v502 = vpop.f32.mrf.mxu0
        %v503 = vadd.f32 0.0, %v502
        %v504 = vpop.f32.mrf.mxu0
        %v505 = vadd.f32 0.0, %v504
        %506 = vmatprep.mubr.f32.mxu0 0.0
        %507 = vmatmul.mubr.f32.gmra.mxu0 %v423
        %v508 = vpop.f32.mrf.mxu0
        %v509 = vadd.f32 0.0, %v508
        %v510 = vpop.f32.mrf.mxu0
        %v511 = vadd.f32 0.0, %v510
        %512 = vdwg.mxu0
        %v513 = vadd.f32 %v380, %v497
        %v514 = vadd.f32 %v382, %v499
        %v515 = vadd.f32 %v386, %v503
        %v516 = vadd.f32 %v388, %v505
        %v517 = vadd.f32 %v392, %v509
        %v518 = vadd.f32 %v394, %v511
        %v519 = vtanh.pop %v513
        %v520 = vtanh.pop %v514
        %v521 = vtanh.pop %v515
        %v522 = vtanh.pop %v516
        %v523 = vtanh.pop %v517
        %v524 = vtanh.pop %v518
        %525 = vst [vmem:[%s167] sm:$0xff] %v519
        %526 = vst [vmem:[%s167 + $0x8] sm:$0xff] %v520
        %527 = vst [vmem:[%s167 + $0x10] sm:$0xff] %v521
        %528 = vst [vmem:[%s167 + $0x18] sm:$0xff] %v522
        %529 = vst [vmem:[%s167 + $0x20] sm:$0xf] %v523
        %530 = vst [vmem:[%s167 + $0x28] sm:$0xf] %v524
        %s531 = sand.u32 %s71, 1
        %s532 = scalar_lea.sflag [#allocation4], %s531
        %s533 = sand.u32 %s71, 1
        %s534 = smul.addr %s533, 48
        %s535 = scalar_lea.vmem [#allocation3], %s534
        // Predicated region
        $region52: #{tpu_custom_call.1} parent=46 // pred_check
          %p536 = pneg %p81
        $region53: #{tpu_custom_call.1} parent=46 // pred_check_branch
          %538 = sbr.rel (%p536) target = $region55
        $region54: #{tpu_custom_call.1} parent=46 // pred_region
          %s539 = smul.u32 2, %s16
          %s541 = ssub.s32 768, 768
          %542 = vsyncadd %s532, %s541
          %s543 = smul.addr %s539, 128
          %s544 = scalar_lea.hbm %s2, %s543
          %s545 = sshll.u32 %s535, 4
          %s546 = int_to_ptr.vmem [resolvable:$true] %s545
          %551 = dma.vmem_to_hbm [thread:$0]  %s546, 768, %s544, %s532, 256, 512, 16
        $region55: #{tpu_custom_call.1} parent=46 // pred_fallthru
          _
      $region47: #{tpu_custom_call.1} parent=5 // pred_fallthru
        _
      %p552 = scmp.le.s32.totalorder 2, %s11
      // Predicated region
      $region56: #{tpu_custom_call.1} parent=5 // pred_check
        %p553 = pneg %p552
      $region57: #{tpu_custom_call.1} parent=5 // pred_check_branch
        %555 = sbr.rel (%p553) target = $region59
      $region58: #{tpu_custom_call.1} parent=5 // pred_region
        %s556 = ssub.s32 %s11, 2
        // Predicated region
        $region60: #{tpu_custom_call.1} parent=58 // pred_check
          %p557 = pneg %p87
        $region61: #{tpu_custom_call.1} parent=58 // pred_check_branch
          %559 = sbr.rel (%p557) target = $region63
        $region62: #{tpu_custom_call.1} parent=58 // pred_region
          %s560 = sand.u32 %s72, 1
          %s561 = scalar_lea.sflag [#allocation4], %s560
          %s562 = sand.u32 %s72, 1
          %s563 = smul.addr %s562, 48
          %s564 = scalar_lea.vmem [#allocation3], %s563
          %565 = dma.done %s561, 768
        $region63: #{tpu_custom_call.1} parent=58 // pred_fallthru
          _
      $region59: #{tpu_custom_call.1} parent=5 // pred_fallthru
        _
    $region6: #{tpu_custom_call.1} parent=1 // loop_footer
      %s15 = sadd.s32 1, %s11
    $region7: #{tpu_custom_call.1} parent=1 // loop_footer_branch
      %10 = sbr.rel target = $region3
    $region8: #{tpu_custom_call.1} parent=1 // loop_exit
      _
    %566 = vsyncpa [#allocation4], 1
    %s567 = scalar_lea.sflag [#allocation4], 1
    %568 = vsyncpa %s567, 1

</llo_original>
